<compile_context>
chip_gen: v6e
topology: v6e:2x2x1
jax: 0.10.0
libtpu: 0.0.40
codegen_flags: <defaults>
</compile_context>

<pallas_src>
import functools

import jax
import jax.numpy as jnp
from jax import lax
from jax.experimental import pallas as pl
from jax.experimental.pallas import tpu as pltpu


def _round_up(x, m):
    return ((x + m - 1) // m) * m


def _round_down_min(x, m):
    return max(m, (x // m) * m)


def _vmem_budget_and_target():
    """Returns (VMEM byte budget used for planning, per-tile HBM-stream target)."""
    try:
        phys = int(pltpu.get_tpu_info().vmem_capacity_bytes)
    except Exception:                       # interpret mode / older API
        phys = 128 * 1024 * 1024
    if phys <= 64 * 1024 * 1024:            # v7x: 64 MiB physical per core
        return 32 * 1024 * 1024, 2 * 1024 * 1024
    return 48 * 1024 * 1024, 4 * 1024 * 1024  # v5e / v6e: 128 MiB physical


def _plan_d_tile(D, itemsize, sub, budget, target):
    """Feature block: full D unless even a minimal-height tile would blow VMEM."""
    if D > 128 and 2 * sub * D * itemsize > budget // 4:
        td = _round_down_min(min(target // max(1, sub * itemsize), D), 128)
        return min(td, _round_down_min(D, 128))
    return D


def _plan_b_tile(B, TD, itemsize, sub, target):
    """Batch block: ~target bytes of rows, sublane-rounded, >= ~8 grid steps."""
    if B <= sub:
        return B                            # trivial problem: one full block
    tb = _round_down_min(min(target // max(1, TD * itemsize), B), sub)
    # Keep at least ~8 batch steps so the "parallel" axis feeds both v7x
    # TensorCores (and the software pipeline) instead of collapsing to grid=(1,).
    tb = min(tb, _round_up(pl.cdiv(B, 8), sub))
    return max(sub, min(tb, 1024))


def _vmem_limit_bytes(TB, TD, h_isz, w_isz, budget):
    """Scoped-VMEM request derived from the actual (layout-padded) footprint."""
    rows = _round_up(TB, 8)
    lanes = _round_up(TD, 128)
    h_buf = 2 * rows * lanes * h_isz        # double-buffered activation tile
    w_buf = 2 * 8 * lanes * w_isz           # weight block (<=2 bufs, 8-sublane pad)
    o_buf = 3 * rows * 128 * 4              # output block (x2) + f32 accumulator
    temps = TB * TD * 4                     # headroom for in-kernel temporaries
    need = h_buf + w_buf + o_buf + temps + (2 << 20)
    return int(min(max(need, 16 << 20), budget))


def _gemv_kernel(h_ref, w_ref, b_ref, o_ref, acc_ref, *, block_d, d_total):
    """One (TB, TD) tile of out[i] = sum_d h[i, d] * w[0, d]  (+ bias at the end)."""
    k = pl.program_id(1)
    nk = pl.num_programs(1)

    @pl.when(k == 0)
    def _init():
        acc_ref[...] = jnp.zeros_like(acc_ref)

    h = h_ref[...]
    w = w_ref[...]

    rem = d_total % block_d
    if rem != 0:
        # Last feature block is partial: Pallas pads it with unspecified data,
        # so zero the out-of-range lanes of both operands before the MXU.
        limit = jnp.where(k == nk - 1, rem, block_d)
        h = jnp.where(lax.broadcasted_iota(jnp.int32, h.shape, 1) < limit,
                      h, jnp.zeros_like(h))
        w = jnp.where(lax.broadcasted_iota(jnp.int32, w.shape, 1) < limit,
                      w, jnp.zeros_like(w))

    # (TB, TD) x (1, TD) contracted on the lane axis -> (TB, 1), f32 accumulate.
    # Runs on the MXU, which is otherwise idle in this HBM-bound kernel.
    # Note: for strict f32 parity one could request a higher matmul precision;
    # default precision is used here and is well within the decoder's tolerance.
    acc_ref[...] += lax.dot_general(
        h, w,
        dimension_numbers=(((1,), (1,)), ((), ())),
        preferred_element_type=jnp.float32)

    @pl.when(k == nk - 1)
    def _finalize():
        o_ref[...] = acc_ref[...] + b_ref[0]


def mlp_decoder_label(z, weight, bias, *, d_block=None):
    """Pallas implementation of MLPDecoder_label.forward.

    Args:
      z:       (B, ...) input with any trailing shape (f32 or bf16).
      weight:  (1, input_dim) Linear weight (PyTorch convention).
      bias:    (1,) Linear bias.
      d_block: optional feature-block override (multiple of 128), used in tests.
    Returns:
      (B, 1) float32 output (mu_img).
    """
    B = z.shape[0]
    h = z.reshape(B, -1)                    # h = z.view(B, -1): plain-JAX glue
    D = h.shape[1]
    assert weight.size == D, f"weight {weight.shape} does not match input_dim {D}"

    # Stream the weight in the activation dtype (bf16 input -> bf16 weight
    # halves its HBM fetch / VMEM).  Bias is a single f32 scalar in SMEM.
    w = weight.reshape(1, D).astype(h.dtype)
    b = bias.reshape(1).astype(jnp.float32)

    h_isz = jnp.dtype(h.dtype).itemsize
    w_isz = jnp.dtype(w.dtype).itemsize
    sub = 8 * max(1, 4 // h_isz)            # sublane multiple: 8 f32 / 16 bf16 / 32 i8

    budget, target = _vmem_budget_and_target()
    if d_block is not None:
        assert d_block == D or d_block % 128 == 0
        TD = d_block
    else:
        TD = _plan_d_tile(D, h_isz, sub, budget, target)
    TB = _plan_b_tile(B, TD, h_isz, sub, target)

    grid = (pl.cdiv(B, TB), pl.cdiv(D, TD))
    nk = grid[1]

    kernel = functools.partial(_gemv_kernel, block_d=TD, d_total=D)
    cost = pl.CostEstimate(flops=2 * B * D, transcendentals=0,
                           bytes_accessed=B * D * h_isz + D * w_isz + B * 4 + 4)

    def _call(single_buffer_weight):
        w_kwargs = ({"pipeline_mode": pl.Buffered(1)}
                    if single_buffer_weight else {})
        return pl.pallas_call(
            kernel,
            out_shape=jax.ShapeDtypeStruct((B, 1), jnp.float32),
            grid=grid,
            in_specs=[
                pl.BlockSpec((TB, TD), lambda i, k: (i, k)),             # activations
                pl.BlockSpec((1, TD), lambda i, k: (0, k), **w_kwargs),  # weight
                pl.BlockSpec(memory_space=pltpu.MemorySpace.SMEM),       # scalar bias
            ],
            out_specs=pl.BlockSpec((TB, 1), lambda i, k: (i, 0)),
            scratch_shapes=[pltpu.VMEM((TB, 1), jnp.float32)],
            compiler_params=pltpu.CompilerParams(
                dimension_semantics=("parallel", "arbitrary"),
                vmem_limit_bytes=_vmem_limit_bytes(TB, TD, h_isz, w_isz, budget),
            ),
            cost_estimate=cost,
        )(h, w, b)

    if nk == 1:
        # Weight block is pinned (constant index map): its second pipeline
        # buffer is pure VMEM waste -> request single buffering.
        try:
            return _call(True)
        except Exception:
            # Fallback if pl.Buffered(1) is not supported by the installed
            # Pallas version; double-buffered weight is still correct.
            return _call(False)
    return _call(False)


def init_params(key, input_dim):
    """nn.Linear default init: U(-1/sqrt(D), 1/sqrt(D))."""
    kw, kb = jax.random.split(key)
    bound = 1.0 / (input_dim ** 0.5)
    weight = jax.random.uniform(kw, (1, input_dim), jnp.float32, -bound, bound)
    bias = jax.random.uniform(kb, (1,), jnp.float32, -bound, bound)
    return weight, bias


def _reference(z, weight, bias):
    """Exact-f32 elementwise reference (independent of MXU matmul precision)."""
    B = z.shape[0]
    hf = z.reshape(B, -1).astype(jnp.float32)
    wf = weight.reshape(1, -1).astype(z.dtype).astype(jnp.float32)  # same rounding as kernel
    return jnp.sum(hf * wf, axis=-1, keepdims=True) + bias.reshape(1).astype(jnp.float32)


if __name__ == "__main__":
    root = jax.random.PRNGKey(0)
    k1, k2, k3, k4, k5, k6 = jax.random.split(root, 6)

    # Tolerance note: covers MXU default-precision decomposition of f32 matmuls;
    # structural bugs (wrong tiles / masking / bias) produce errors >> 2e-2.
    TOL = 2e-2

    # Case 1: module-shaped input (B, C, H, W) -> flatten -> Linear(D, 1).
    B, C, H, W = 2, 4, 4, 2
    D = C * H * W
    z1 = jax.random.normal(k1, (B, C, H, W), jnp.float32)
    w1, _ = init_params(k2, D)
    b1 = jnp.array([0.37], jnp.float32)     # O(1) bias so a dropped bias is caught
    out1 = jax.block_until_ready(mlp_decoder_label(z1, w1, b1))
    assert out1.shape == (B, 1)
    assert jnp.allclose(out1, _reference(z1, w1, b1), atol=TOL, rtol=TOL)

    # Case 2: multiple batch tiles (partial last one) + feature-axis accumulation.
    B2, D2 = 20, 384
    z2 = jax.random.normal(k3, (B2, D2), jnp.float32)
    w2, _ = init_params(k4, D2)
    b2 = jnp.array([-0.61], jnp.float32)
    out2 = jax.block_until_ready(mlp_decoder_label(z2, w2, b2, d_block=128))
    assert out2.shape == (B2, 1)
    assert jnp.allclose(out2, _reference(z2, w2, b2), atol=TOL, rtol=TOL)

    # Case 3: bf16 streaming dtype + partial (masked) last feature block.
    B3, D3 = 12, 200
    z3 = jax.random.normal(k5, (B3, D3), jnp.float32).astype(jnp.bfloat16)
    w3, _ = init_params(k6, D3)
    b3 = jnp.array([0.52], jnp.float32)
    out3 = jax.block_until_ready(mlp_decoder_label(z3, w3, b3, d_block=128))
    assert out3.shape == (B3, 1)
    assert jnp.allclose(out3, _reference(z3, w3, b3), atol=TOL, rtol=TOL)

    print("KERNEL_OK")
</pallas_src>

<mosaic_0001>
module attributes {stable_mosaic.version = 11 : i64} {
  func.func @_gemv_kernel(%arg0: i32, %arg1: i32, %arg2: memref<2x32xf32, #tpu.memory_space<vmem>>, %arg3: memref<1x32xf32, #tpu.memory_space<vmem>>, %arg4: memref<1xf32, #tpu.memory_space<smem>>, %arg5: memref<2x1xf32, #tpu.memory_space<vmem>>, %arg6: memref<2x1xf32, #tpu.memory_space<vmem>>) attributes {dimension_semantics = [#tpu.dimension_semantics<parallel>, #tpu.dimension_semantics<arbitrary>], iteration_bounds = array<i64: 1, 1>, scalar_prefetch = 0 : i64, scratch_operands = 1 : i64, tpu.core_type = #tpu.core_type<tc>, window_params = [{transform_indices = @transform_0, window_bounds = array<i64: 2, 32>}, {pipeline_mode = #tpu.pipeline_mode<synchronous>, transform_indices = @transform_1, window_bounds = array<i64: 1, 32>}, {transform_indices = @transform_2, window_bounds = array<i64: 1>}, {transform_indices = @transform_3, window_bounds = array<i64: 2, 1>}]} {
    %c0_i32 = arith.constant 0 : i32
    %0 = arith.cmpi eq, %arg1, %c0_i32 : i32
    %1 = arith.extui %0 : i1 to i32
    %c0_i32_0 = arith.constant 0 : i32
    %2 = arith.cmpi ne, %1, %c0_i32_0 : i32
    scf.if %2 {
      %cst_10 = arith.constant 0.000000e+00 : f32
      %12 = vector.broadcast %cst_10 : f32 to vector<2x1xf32>
      %c0_11 = arith.constant 0 : index
      %c0_12 = arith.constant 0 : index
      %13 = vector.load %arg6[%c0_11, %c0_12] : memref<2x1xf32, #tpu.memory_space<vmem>>, vector<2x1xf32>
      tpu.vector_store %arg6[%c0_11, %c0_12], %12 {strides = array<i32>} : memref<2x1xf32, #tpu.memory_space<vmem>>, vector<2x1xf32>,
    } else {
    }
    %c0 = arith.constant 0 : index
    %c0_1 = arith.constant 0 : index
    %3 = vector.load %arg2[%c0, %c0_1] : memref<2x32xf32, #tpu.memory_space<vmem>>, vector<2x32xf32>
    %c0_2 = arith.constant 0 : index
    %c0_3 = arith.constant 0 : index
    %4 = vector.load %arg3[%c0_2, %c0_3] : memref<1x32xf32, #tpu.memory_space<vmem>>, vector<1x32xf32>
    %c0_4 = arith.constant 0 : index
    %c0_5 = arith.constant 0 : index
    %5 = vector.load %arg6[%c0_4, %c0_5] : memref<2x1xf32, #tpu.memory_space<vmem>>, vector<2x1xf32>
    %cst = arith.constant dense<0.000000e+00> : vector<2x1xf32>
    %6 = tpu.matmul %3, %4, %cst {dimension_numbers = #tpu.dot_dimension_numbers<[1], [1], [0], [0], [0, 0, 1, 0], [], []>} : vector<2x32xf32>, vector<1x32xf32>, vector<2x1xf32> -> vector<2x1xf32>
    %7 = arith.addf %5, %6 : vector<2x1xf32>
    %c0_6 = arith.constant 0 : index
    %c0_7 = arith.constant 0 : index
    %8 = vector.load %arg6[%c0_6, %c0_7] : memref<2x1xf32, #tpu.memory_space<vmem>>, vector<2x1xf32>
    tpu.vector_store %arg6[%c0_6, %c0_7], %7 {strides = array<i32>} : memref<2x1xf32, #tpu.memory_space<vmem>>, vector<2x1xf32>,
    %c0_i32_8 = arith.constant 0 : i32
    %9 = arith.cmpi eq, %arg1, %c0_i32_8 : i32
    %10 = arith.extui %9 : i1 to i32
    %c0_i32_9 = arith.constant 0 : i32
    %11 = arith.cmpi ne, %10, %c0_i32_9 : i32
    scf.if %11 {
      %c0_10 = arith.constant 0 : index
      %c0_11 = arith.constant 0 : index
      %12 = vector.load %arg6[%c0_10, %c0_11] : memref<2x1xf32, #tpu.memory_space<vmem>>, vector<2x1xf32>
      %c0_12 = arith.constant 0 : index
      %13 = memref.load %arg4[%c0_12] : memref<1xf32, #tpu.memory_space<smem>>
      %14 = vector.broadcast %13 : f32 to vector<2x1xf32>
      %15 = arith.addf %12, %14 : vector<2x1xf32>
      %c0_13 = arith.constant 0 : index
      %c0_14 = arith.constant 0 : index
      %16 = vector.load %arg5[%c0_13, %c0_14] : memref<2x1xf32, #tpu.memory_space<vmem>>, vector<2x1xf32>
      tpu.vector_store %arg5[%c0_13, %c0_14], %15 {strides = array<i32>} : memref<2x1xf32, #tpu.memory_space<vmem>>, vector<2x1xf32>,
    } else {
    }
    return
  }
  func.func @transform_0(%arg0: i32, %arg1: i32) -> (i32, i32) {
    %c0_i32 = arith.constant 0 : i32
    return %arg0, %arg1 : i32, i32
  }
  func.func @transform_1(%arg0: i32, %arg1: i32) -> (i32, i32) {
    %c0_i32 = arith.constant 0 : i32
    %c0_i32_0 = arith.constant 0 : i32
    return %c0_i32, %arg1 : i32, i32
  }
  func.func @transform_2(%arg0: i32, %arg1: i32) -> i32 {
    %c0_i32 = arith.constant 0 : i32
    %c0_i32_0 = arith.constant 0 : i32
    return %c0_i32 : i32
  }
  func.func @transform_3(%arg0: i32, %arg1: i32) -> (i32, i32) {
    %c0_i32 = arith.constant 0 : i32
    %c0_i32_0 = arith.constant 0 : i32
    return %arg0, %c0_i32 : i32, i32
  }
}

module attributes {stable_mosaic.version = 11 : i64} {
  func.func @_gemv_kernel(%arg0: i32, %arg1: i32, %arg2: memref<2x32xf32, #tpu.memory_space<vmem>>, %arg3: memref<1x32xf32, #tpu.memory_space<vmem>>, %arg4: memref<1xf32, #tpu.memory_space<smem>>, %arg5: memref<2x1xf32, #tpu.memory_space<vmem>>, %arg6: memref<2x1xf32, #tpu.memory_space<vmem>>) attributes {dimension_semantics = [#tpu.dimension_semantics<parallel>, #tpu.dimension_semantics<arbitrary>], iteration_bounds = array<i64: 1, 1>, scalar_prefetch = 0 : i64, scratch_operands = 1 : i64, tpu.core_type = #tpu.core_type<tc>, window_params = [{transform_indices = @transform_0, window_bounds = array<i64: 2, 32>}, {transform_indices = @transform_1, window_bounds = array<i64: 1, 32>}, {transform_indices = @transform_2, window_bounds = array<i64: 1>}, {transform_indices = @transform_3, window_bounds = array<i64: 2, 1>}]} {
    %c0_i32 = arith.constant 0 : i32
    %0 = arith.cmpi eq, %arg1, %c0_i32 : i32
    %1 = arith.extui %0 : i1 to i32
    %c0_i32_0 = arith.constant 0 : i32
    %2 = arith.cmpi ne, %1, %c0_i32_0 : i32
    scf.if %2 {
      %cst_10 = arith.constant 0.000000e+00 : f32
      %12 = vector.broadcast %cst_10 : f32 to vector<2x1xf32>
      %c0_11 = arith.constant 0 : index
      %c0_12 = arith.constant 0 : index
      %13 = vector.load %arg6[%c0_11, %c0_12] : memref<2x1xf32, #tpu.memory_space<vmem>>, vector<2x1xf32>
      tpu.vector_store %arg6[%c0_11, %c0_12], %12 {strides = array<i32>} : memref<2x1xf32, #tpu.memory_space<vmem>>, vector<2x1xf32>,
    } else {
    }
    %c0 = arith.constant 0 : index
    %c0_1 = arith.constant 0 : index
    %3 = vector.load %arg2[%c0, %c0_1] : memref<2x32xf32, #tpu.memory_space<vmem>>, vector<2x32xf32>
    %c0_2 = arith.constant 0 : index
    %c0_3 = arith.constant 0 : index
    %4 = vector.load %arg3[%c0_2, %c0_3] : memref<1x32xf32, #tpu.memory_space<vmem>>, vector<1x32xf32>
    %c0_4 = arith.constant 0 : index
    %c0_5 = arith.constant 0 : index
    %5 = vector.load %arg6[%c0_4, %c0_5] : memref<2x1xf32, #tpu.memory_space<vmem>>, vector<2x1xf32>
    %cst = arith.constant dense<0.000000e+00> : vector<2x1xf32>
    %6 = tpu.matmul %3, %4, %cst {dimension_numbers = #tpu.dot_dimension_numbers<[1], [1], [0], [0], [0, 0, 1, 0], [], []>} : vector<2x32xf32>, vector<1x32xf32>, vector<2x1xf32> -> vector<2x1xf32>
    %7 = arith.addf %5, %6 : vector<2x1xf32>
    %c0_6 = arith.constant 0 : index
    %c0_7 = arith.constant 0 : index
    %8 = vector.load %arg6[%c0_6, %c0_7] : memref<2x1xf32, #tpu.memory_space<vmem>>, vector<2x1xf32>
    tpu.vector_store %arg6[%c0_6, %c0_7], %7 {strides = array<i32>} : memref<2x1xf32, #tpu.memory_space<vmem>>, vector<2x1xf32>,
    %c0_i32_8 = arith.constant 0 : i32
    %9 = arith.cmpi eq, %arg1, %c0_i32_8 : i32
    %10 = arith.extui %9 : i1 to i32
    %c0_i32_9 = arith.constant 0 : i32
    %11 = arith.cmpi ne, %10, %c0_i32_9 : i32
    scf.if %11 {
      %c0_10 = arith.constant 0 : index
      %c0_11 = arith.constant 0 : index
      %12 = vector.load %arg6[%c0_10, %c0_11] : memref<2x1xf32, #tpu.memory_space<vmem>>, vector<2x1xf32>
      %c0_12 = arith.constant 0 : index
      %13 = memref.load %arg4[%c0_12] : memref<1xf32, #tpu.memory_space<smem>>
      %14 = vector.broadcast %13 : f32 to vector<2x1xf32>
      %15 = arith.addf %12, %14 : vector<2x1xf32>
      %c0_13 = arith.constant 0 : index
      %c0_14 = arith.constant 0 : index
      %16 = vector.load %arg5[%c0_13, %c0_14] : memref<2x1xf32, #tpu.memory_space<vmem>>, vector<2x1xf32>
      tpu.vector_store %arg5[%c0_13, %c0_14], %15 {strides = array<i32>} : memref<2x1xf32, #tpu.memory_space<vmem>>, vector<2x1xf32>,
    } else {
    }
    return
  }
  func.func @transform_0(%arg0: i32, %arg1: i32) -> (i32, i32) {
    %c0_i32 = arith.constant 0 : i32
    return %arg0, %arg1 : i32, i32
  }
  func.func @transform_1(%arg0: i32, %arg1: i32) -> (i32, i32) {
    %c0_i32 = arith.constant 0 : i32
    %c0_i32_0 = arith.constant 0 : i32
    return %c0_i32, %arg1 : i32, i32
  }
  func.func @transform_2(%arg0: i32, %arg1: i32) -> i32 {
    %c0_i32 = arith.constant 0 : i32
    %c0_i32_0 = arith.constant 0 : i32
    return %c0_i32 : i32
  }
  func.func @transform_3(%arg0: i32, %arg1: i32) -> (i32, i32) {
    %c0_i32 = arith.constant 0 : i32
    %c0_i32_0 = arith.constant 0 : i32
    return %arg0, %c0_i32 : i32, i32
  }
}

</mosaic_0001>

<llo_original>
// kernel: tpu_custom_call.1
$region0: #{tpu_custom_call.1}
  #allocation0 [shape = 'u32[]', space=smem, size = 0x4, offset = 0x4, fixed_abs, tag = 'smem constant byte address 0x4 - core index']
  #allocation1 [shape = 'u32[144,128]{1,0:T(1,128)}', space=vmem, size = 0x12000, scoped, tag = 'internal scratch']
  #allocation2 [shape = 'f32[2,1]{1,0:T(2,128)}', space=vmem, size = 0x400, scoped, tag = 'scratch operand']
  #allocation3 [shape = 'f32[1]{0:T(128)S(6)}', space=smem, size = 0x200, scoped, tag = 'scoped memory for tpu_custom_call.1']
  %s0 = inlined_call_operand.vmem [shape: f32[2,32], index: 0, kind: input, shape index: {}]
  %s1 = inlined_call_operand.vmem [shape: f32[1,32], index: 1, kind: input, shape index: {}]
  %s2 = inlined_call_operand.<no memory space> [shape: f32[1], index: 2, kind: input, shape index: {}]
  %s3 = inlined_call_operand.vmem [shape: f32[2,1], index: 3, kind: output, shape index: {}]
  %s4 = sld [smem:[#allocation0]]
  $region30: #{tpu_custom_call.1} parent=0
    _
  %s6 = ssub.s32 1, %s4
  %s7 = scalar_select 0, %s6, %s4
  %8 = sst [smem:[#allocation3]] %s2
  // Predicated region
  $region2: #{tpu_custom_call.1} parent=0 // pred_check
    _
  $region3: #{tpu_custom_call.1} parent=0 // pred_check_branch
    %10 = sbr.rel (0) target = $region5
  $region4: #{tpu_custom_call.1} parent=0 // pred_region
    _
  $region5: #{tpu_custom_call.1} parent=0 // pred_fallthru
    _
  // Predicated region
  $region6: #{tpu_custom_call.1} parent=0 // pred_check
    _
  $region7: #{tpu_custom_call.1} parent=0 // pred_check_branch
    %12 = sbr.rel (0) target = $region9
  $region8: #{tpu_custom_call.1} parent=0 // pred_region
    _
  $region9: #{tpu_custom_call.1} parent=0 // pred_fallthru
    _
  // Predicated region
  $region10: #{tpu_custom_call.1} parent=0 // pred_check
    _
  $region11: #{tpu_custom_call.1} parent=0 // pred_check_branch
    %14 = sbr.rel (0) target = $region13
  $region12: #{tpu_custom_call.1} parent=0 // pred_region
    _
  $region13: #{tpu_custom_call.1} parent=0 // pred_fallthru
    _
  %p15 = scmp.eq.s32.totalorder 0, 0
  // Predicated region
  $region14: #{tpu_custom_call.1} parent=0 // pred_check
    %p16 = pneg %p15
  $region15: #{tpu_custom_call.1} parent=0 // pred_check_branch
    %18 = sbr.rel (%p16) target = $region17
  $region16: #{tpu_custom_call.1} parent=0 // pred_region
    %vm19 = vcmask 1024
    %20 = vst.msk [vmem:[#allocation2] sm:$0x3] %vm19, 0.0
  $region17: #{tpu_custom_call.1} parent=0 // pred_fallthru
    _
  %v21 = vld [vmem:[%s0] sm:$0x3]
  %v22 = vld [vmem:[%s1] sm:$0x1]
  %v23 = vld [vmem:[#allocation2] sm:$0x3]
  %v25 = vlaneseq
  %v26 = vshrl.u32 %v25, 7
  %v27 = vsub.s32 0, %v26
  %v28 = vrot.slane %v22, %v27
  %v30 = vmul.f32 %v21, %v28
  %vm31 = vcmask 254976
  %v32 = vsel %vm31, %v30, 0.0
  %33 = vadd.xlane.f32.xlu0 %v32
  %v34 = vpop.xlane.xlu0 %33
  %v35 = vadd.f32 %v23, %v34
  %vm36 = vcmask 1024
  %37 = vst.msk [vmem:[#allocation2] sm:$0x3] %vm36, %v35
  // Predicated region
  $region18: #{tpu_custom_call.1} parent=0 // pred_check
    %p38 = pneg %p15
  $region19: #{tpu_custom_call.1} parent=0 // pred_check_branch
    %40 = sbr.rel (%p38) target = $region21
  $region20: #{tpu_custom_call.1} parent=0 // pred_region
    %v41 = vld [vmem:[#allocation2] sm:$0x3]
    %s42 = sld [smem:[#allocation3]]
    %v43 = vstv %s42
    %v44 = vadd.f32 %v41, %v43
    %45 = vst.msk [vmem:[%s3] sm:$0x3] %vm36, %v44
  $region21: #{tpu_custom_call.1} parent=0 // pred_fallthru
    _
  // Predicated region
  $region22: #{tpu_custom_call.1} parent=0 // pred_check
    _
  $region23: #{tpu_custom_call.1} parent=0 // pred_check_branch
    %47 = sbr.rel (0) target = $region25
  $region24: #{tpu_custom_call.1} parent=0 // pred_region
    _
  $region25: #{tpu_custom_call.1} parent=0 // pred_fallthru
    _
  // Predicated region
  $region26: #{tpu_custom_call.1} parent=0 // pred_check
    _
  $region27: #{tpu_custom_call.1} parent=0 // pred_check_branch
    %49 = sbr.rel (0) target = $region29
  $region28: #{tpu_custom_call.1} parent=0 // pred_region
    _
  $region29: #{tpu_custom_call.1} parent=0 // pred_fallthru
    _

// kernel: tpu_custom_call.1
$region0: #{tpu_custom_call.1}
  #allocation0 [shape = 'u32[]', space=smem, size = 0x4, offset = 0x4, fixed_abs, tag = 'smem constant byte address 0x4 - core index']
  #allocation1 [shape = 'u32[144,128]{1,0:T(1,128)}', space=vmem, size = 0x12000, scoped, tag = 'internal scratch']
  #allocation2 [shape = 'f32[2,1]{1,0:T(2,128)}', space=vmem, size = 0x400, scoped, tag = 'scratch operand']
  #allocation3 [shape = 'f32[1]{0:T(128)S(6)}', space=smem, size = 0x200, scoped, tag = 'scoped memory for tpu_custom_call.1']
  %s0 = inlined_call_operand.vmem [shape: f32[2,32], index: 0, kind: input, shape index: {}]
  %s1 = inlined_call_operand.vmem [shape: f32[1,32], index: 1, kind: input, shape index: {}]
  %s2 = inlined_call_operand.<no memory space> [shape: f32[1], index: 2, kind: input, shape index: {}]
  %s3 = inlined_call_operand.vmem [shape: f32[2,1], index: 3, kind: output, shape index: {}]
  %s4 = sld [smem:[#allocation0]]
  $region30: #{tpu_custom_call.1} parent=0
    _
  %s6 = ssub.s32 1, %s4
  %s7 = scalar_select 0, %s6, %s4
  %8 = sst [smem:[#allocation3]] %s2
  // Predicated region
  $region2: #{tpu_custom_call.1} parent=0 // pred_check
    _
  $region3: #{tpu_custom_call.1} parent=0 // pred_check_branch
    %10 = sbr.rel (0) target = $region5
  $region4: #{tpu_custom_call.1} parent=0 // pred_region
    _
  $region5: #{tpu_custom_call.1} parent=0 // pred_fallthru
    _
  // Predicated region
  $region6: #{tpu_custom_call.1} parent=0 // pred_check
    _
  $region7: #{tpu_custom_call.1} parent=0 // pred_check_branch
    %12 = sbr.rel (0) target = $region9
  $region8: #{tpu_custom_call.1} parent=0 // pred_region
    _
  $region9: #{tpu_custom_call.1} parent=0 // pred_fallthru
    _
  // Predicated region
  $region10: #{tpu_custom_call.1} parent=0 // pred_check
    _
  $region11: #{tpu_custom_call.1} parent=0 // pred_check_branch
    %14 = sbr.rel (0) target = $region13
  $region12: #{tpu_custom_call.1} parent=0 // pred_region
    _
  $region13: #{tpu_custom_call.1} parent=0 // pred_fallthru
    _
  %p15 = scmp.eq.s32.totalorder 0, 0
  // Predicated region
  $region14: #{tpu_custom_call.1} parent=0 // pred_check
    %p16 = pneg %p15
  $region15: #{tpu_custom_call.1} parent=0 // pred_check_branch
    %18 = sbr.rel (%p16) target = $region17
  $region16: #{tpu_custom_call.1} parent=0 // pred_region
    %vm19 = vcmask 1024
    %20 = vst.msk [vmem:[#allocation2] sm:$0x3] %vm19, 0.0
  $region17: #{tpu_custom_call.1} parent=0 // pred_fallthru
    _
  %v21 = vld [vmem:[%s0] sm:$0x3]
  %v22 = vld [vmem:[%s1] sm:$0x1]
  %v23 = vld [vmem:[#allocation2] sm:$0x3]
  %v25 = vlaneseq
  %v26 = vshrl.u32 %v25, 7
  %v27 = vsub.s32 0, %v26
  %v28 = vrot.slane %v22, %v27
  %v30 = vmul.f32 %v21, %v28
  %vm31 = vcmask 254976
  %v32 = vsel %vm31, %v30, 0.0
  %33 = vadd.xlane.f32.xlu0 %v32
  %v34 = vpop.xlane.xlu0 %33
  %v35 = vadd.f32 %v23, %v34
  %vm36 = vcmask 1024
  %37 = vst.msk [vmem:[#allocation2] sm:$0x3] %vm36, %v35
  // Predicated region
  $region18: #{tpu_custom_call.1} parent=0 // pred_check
    %p38 = pneg %p15
  $region19: #{tpu_custom_call.1} parent=0 // pred_check_branch
    %40 = sbr.rel (%p38) target = $region21
  $region20: #{tpu_custom_call.1} parent=0 // pred_region
    %v41 = vld [vmem:[#allocation2] sm:$0x3]
    %s42 = sld [smem:[#allocation3]]
    %v43 = vstv %s42
    %v44 = vadd.f32 %v41, %v43
    %45 = vst.msk [vmem:[%s3] sm:$0x3] %vm36, %v44
  $region21: #{tpu_custom_call.1} parent=0 // pred_fallthru
    _
  // Predicated region
  $region22: #{tpu_custom_call.1} parent=0 // pred_check
    _
  $region23: #{tpu_custom_call.1} parent=0 // pred_check_branch
    %47 = sbr.rel (0) target = $region25
  $region24: #{tpu_custom_call.1} parent=0 // pred_region
    _
  $region25: #{tpu_custom_call.1} parent=0 // pred_fallthru
    _
  // Predicated region
  $region26: #{tpu_custom_call.1} parent=0 // pred_check
    _
  $region27: #{tpu_custom_call.1} parent=0 // pred_check_branch
    %49 = sbr.rel (0) target = $region29
  $region28: #{tpu_custom_call.1} parent=0 // pred_region
    _
  $region29: #{tpu_custom_call.1} parent=0 // pred_fallthru
    _

</llo_original>
